<compile_context>
chip_gen: v7x
topology: tpu7x:2x2x1
jax: 0.10.0
libtpu: 0.0.40
codegen_flags: <defaults>
</compile_context>

<pallas_src>
import jax
import jax.numpy as jnp
from jax.experimental import pallas as pl
from jax.experimental.pallas import tpu as pltpu


def _round_up(x, m):
    return ((x + m - 1) // m) * m


def _mlp_all_kernel(x_ref, w_in_ref, b_in_ref, wh_ref, bh_ref, wo_ref, bo_ref, out_ref):
    # hidden_1 = relu(x @ W_in + b_in)   (board/stockfish/moves matmuls fused in wrapper)
    h1 = jnp.dot(x_ref[...], w_in_ref[...], preferred_element_type=jnp.float32)
    h1 = jnp.maximum(h1 + b_in_ref[...], 0.0)

    # TODO(synk): Dropout(0.1) skipped — inference/eval semantics (identity).

    # hidden_2 = relu(hidden_1 @ Wh + bh)
    h2 = jnp.dot(h1.astype(wh_ref.dtype), wh_ref[...], preferred_element_type=jnp.float32)
    h2 = jnp.maximum(h2 + bh_ref[...], 0.0)

    # Final [H2 -> 1] layer on VPU + XLU (avoids an N=1 MXU matmul):
    # broadcast-multiply by the output weight row and reduce over the lane axis.
    logits = jnp.sum(h2 * wo_ref[...], axis=-1, keepdims=True) + bo_ref[...]
    out_ref[...] = logits.astype(out_ref.dtype)


def neural_net_all_forward(board, sf_eval, moves, params, *,
                           block_batch=512, compute_dtype=jnp.bfloat16):
    """board: [B, Fb], sf_eval: [B, Fs], moves: [B, Fm]  ->  logits [B]."""
    (wb, bb, ws, bs, wm, bm, wh, bh, wo, bo) = params
    B = board.shape[0]

    # --- Fuse the three input layers into a single matmul (wrapper-side packing) ---
    x = jnp.concatenate([board, sf_eval, moves], axis=1)      # [B, Fb+Fs+Fm]
    w_in = jnp.concatenate([wb, ws, wm], axis=0)              # [Fb+Fs+Fm, H1]
    b_in = (bb + bs + bm).astype(jnp.float32)                 # [1, H1]
    wo_row = wo.reshape(1, -1).astype(jnp.float32)            # [1, H2]
    bo_f = bo.astype(jnp.float32)                             # [1, 1]
    bh_f = bh.astype(jnp.float32)                             # [1, H2]

    F = x.shape[1]
    H1 = w_in.shape[1]
    H2 = wh.shape[1]

    # bf16 matmul operands halve HBM traffic (kernel is memory-bound); accumulation
    # stays f32 inside the kernel, elementwise work stays f32.
    x = x.astype(compute_dtype)
    w_in = w_in.astype(compute_dtype)
    wh_c = wh.astype(compute_dtype)

    # --- Batch tiling: 1-D grid over batch; weights/biases VMEM-resident across steps.
    # TILE_B multiple of 16 (safe for bf16 sublane packing and f32 (8,128) tiling).
    tile_b = max(16, min(int(block_batch), _round_up(B, 16)))
    b_pad = _round_up(B, tile_b)
    if b_pad != B:
        x = jnp.pad(x, ((0, b_pad - B), (0, 0)))

    const = lambda i: (0, 0)

    out = pl.pallas_call(
        _mlp_all_kernel,
        out_shape=jax.ShapeDtypeStruct((b_pad, 1), jnp.float32),
        grid=(b_pad // tile_b,),
        in_specs=[
            pl.BlockSpec((tile_b, F), lambda i: (i, 0)),   # fused activations (tiled)
            pl.BlockSpec((F, H1), const),                  # fused input weight
            pl.BlockSpec((1, H1), const),                  # fused input bias
            pl.BlockSpec((H1, H2), const),                 # hidden weight
            pl.BlockSpec((1, H2), const),                  # hidden bias
            pl.BlockSpec((1, H2), const),                  # output weight (as a row)
            pl.BlockSpec((1, 1), const),                   # output bias
        ],
        out_specs=pl.BlockSpec((tile_b, 1), lambda i: (i, 0)),
        compiler_params=pltpu.CompilerParams(
            dimension_semantics=("parallel",),
        ),
    )(x, w_in, b_in, wh_c, bh_f, wo_row, bo_f)

    # squeeze(dim=1) as in the PyTorch module (and drop batch padding).
    return out[:B, 0]


def init_params(key, num_features_board, num_features_stockfish,
                num_features_moves, hidden_units_1, hidden_units_2):
    """Deterministic synthetic params. Weights are [in, out]; biases [1, out]."""
    ks = jax.random.split(key, 10)

    def w(k, fan_in, fan_out):
        bound = 1.0 / jnp.sqrt(fan_in)
        return jax.random.uniform(k, (fan_in, fan_out), jnp.float32, -bound, bound)

    def b(k, fan_in, fan_out):
        bound = 1.0 / jnp.sqrt(fan_in)
        return jax.random.uniform(k, (1, fan_out), jnp.float32, -bound, bound)

    wb = w(ks[0], num_features_board, hidden_units_1)
    bb = b(ks[1], num_features_board, hidden_units_1)
    ws = w(ks[2], num_features_stockfish, hidden_units_1)
    bs = b(ks[3], num_features_stockfish, hidden_units_1)
    wm = w(ks[4], num_features_moves, hidden_units_1)
    bm = b(ks[5], num_features_moves, hidden_units_1)
    wh = w(ks[6], hidden_units_1, hidden_units_2)
    bh = b(ks[7], hidden_units_1, hidden_units_2)
    wo = w(ks[8], hidden_units_2, 1)
    bo = b(ks[9], hidden_units_2, 1)
    return (wb, bb, ws, bs, wm, bm, wh, bh, wo, bo)


def _reference_forward(board, sf_eval, moves, params):
    (wb, bb, ws, bs, wm, bm, wh, bh, wo, bo) = params
    h1 = jnp.maximum(board @ wb + bb + sf_eval @ ws + bs + moves @ wm + bm, 0.0)
    h2 = jnp.maximum(h1 @ wh + bh, 0.0)
    return (h2 @ wo + bo)[:, 0]


if __name__ == "__main__":
    # Small, forward-consistent shapes.
    B = 8
    num_features_board = 64
    num_features_stockfish = 8
    num_features_moves = 16
    hidden_units_1 = 32
    hidden_units_2 = 32

    key = jax.random.PRNGKey(0)
    k_board, k_sf, k_mv, k_params = jax.random.split(key, 4)

    board = jax.random.normal(k_board, (B, num_features_board), jnp.float32)
    sf_eval = jax.random.normal(k_sf, (B, num_features_stockfish), jnp.float32)
    moves = jax.random.normal(k_mv, (B, num_features_moves), jnp.float32)

    params = init_params(k_params, num_features_board, num_features_stockfish,
                         num_features_moves, hidden_units_1, hidden_units_2)

    ref = _reference_forward(board, sf_eval, moves, params)

    # f32 path: tight numerical check against the reference.
    logits_f32 = jax.block_until_ready(
        neural_net_all_forward(board, sf_eval, moves, params,
                               compute_dtype=jnp.float32))
    assert logits_f32.shape == (B,)
    assert jnp.allclose(logits_f32, ref, atol=1e-4, rtol=1e-4)

    # bf16 path (default, bandwidth-optimized): looser tolerance.
    logits_bf16 = jax.block_until_ready(
        neural_net_all_forward(board, sf_eval, moves, params))
    assert logits_bf16.shape == (B,)
    assert jnp.allclose(logits_bf16, ref, atol=5e-2, rtol=5e-2)

    print("KERNEL_OK")
</pallas_src>

<mosaic_0001>
module attributes {stable_mosaic.version = 11 : i64} {
  func.func @_mlp_all_kernel(%arg0: i32, %arg1: memref<16x88xf32, #tpu.memory_space<vmem>>, %arg2: memref<88x32xf32, #tpu.memory_space<vmem>>, %arg3: memref<1x32xf32, #tpu.memory_space<vmem>>, %arg4: memref<32x32xf32, #tpu.memory_space<vmem>>, %arg5: memref<1x32xf32, #tpu.memory_space<vmem>>, %arg6: memref<1x32xf32, #tpu.memory_space<vmem>>, %arg7: memref<1x1xf32, #tpu.memory_space<vmem>>, %arg8: memref<16x1xf32, #tpu.memory_space<vmem>>) attributes {dimension_semantics = [#tpu.dimension_semantics<parallel>], iteration_bounds = array<i64: 1>, scalar_prefetch = 0 : i64, scratch_operands = 0 : i64, tpu.core_type = #tpu.core_type<tc>, window_params = [{transform_indices = @transform_0, window_bounds = array<i64: 16, 88>}, {pipeline_mode = #tpu.pipeline_mode<synchronous>, transform_indices = @transform_1, window_bounds = array<i64: 88, 32>}, {pipeline_mode = #tpu.pipeline_mode<synchronous>, transform_indices = @transform_2, window_bounds = array<i64: 1, 32>}, {pipeline_mode = #tpu.pipeline_mode<synchronous>, transform_indices = @transform_3, window_bounds = array<i64: 32, 32>}, {pipeline_mode = #tpu.pipeline_mode<synchronous>, transform_indices = @transform_4, window_bounds = array<i64: 1, 32>}, {pipeline_mode = #tpu.pipeline_mode<synchronous>, transform_indices = @transform_5, window_bounds = array<i64: 1, 32>}, {pipeline_mode = #tpu.pipeline_mode<synchronous>, transform_indices = @transform_6, window_bounds = array<i64: 1, 1>}, {transform_indices = @transform_7, window_bounds = array<i64: 16, 1>}]} {
    %c0 = arith.constant 0 : index
    %c0_0 = arith.constant 0 : index
    %0 = vector.load %arg1[%c0, %c0_0] : memref<16x88xf32, #tpu.memory_space<vmem>>, vector<16x88xf32>
    %c0_1 = arith.constant 0 : index
    %c0_2 = arith.constant 0 : index
    %1 = vector.load %arg2[%c0_1, %c0_2] : memref<88x32xf32, #tpu.memory_space<vmem>>, vector<88x32xf32>
    %cst = arith.constant dense<0.000000e+00> : vector<16x32xf32>
    %2 = tpu.matmul %0, %1, %cst {dimension_numbers = #tpu.dot_dimension_numbers<[1], [0], [0], [1], [0, 0, 1, 1], [], []>} : vector<16x88xf32>, vector<88x32xf32>, vector<16x32xf32> -> vector<16x32xf32>
    %c0_3 = arith.constant 0 : index
    %c0_4 = arith.constant 0 : index
    %3 = vector.load %arg3[%c0_3, %c0_4] : memref<1x32xf32, #tpu.memory_space<vmem>>, vector<1x32xf32>
    %4 = vector.broadcast %3 : vector<1x32xf32> to vector<16x32xf32>
    %5 = arith.addf %2, %4 : vector<16x32xf32>
    %cst_5 = arith.constant 0.000000e+00 : f32
    %6 = vector.broadcast %cst_5 : f32 to vector<16x32xf32>
    %7 = arith.maximumf %5, %6 : vector<16x32xf32>
    %c0_6 = arith.constant 0 : index
    %c0_7 = arith.constant 0 : index
    %8 = vector.load %arg4[%c0_6, %c0_7] : memref<32x32xf32, #tpu.memory_space<vmem>>, vector<32x32xf32>
    %cst_8 = arith.constant dense<0.000000e+00> : vector<16x32xf32>
    %9 = tpu.matmul %7, %8, %cst_8 {dimension_numbers = #tpu.dot_dimension_numbers<[1], [0], [0], [1], [0, 0, 1, 1], [], []>} : vector<16x32xf32>, vector<32x32xf32>, vector<16x32xf32> -> vector<16x32xf32>
    %c0_9 = arith.constant 0 : index
    %c0_10 = arith.constant 0 : index
    %10 = vector.load %arg5[%c0_9, %c0_10] : memref<1x32xf32, #tpu.memory_space<vmem>>, vector<1x32xf32>
    %11 = vector.broadcast %10 : vector<1x32xf32> to vector<16x32xf32>
    %12 = arith.addf %9, %11 : vector<16x32xf32>
    %cst_11 = arith.constant 0.000000e+00 : f32
    %13 = vector.broadcast %cst_11 : f32 to vector<16x32xf32>
    %14 = arith.maximumf %12, %13 : vector<16x32xf32>
    %c0_12 = arith.constant 0 : index
    %c0_13 = arith.constant 0 : index
    %15 = vector.load %arg6[%c0_12, %c0_13] : memref<1x32xf32, #tpu.memory_space<vmem>>, vector<1x32xf32>
    %16 = vector.broadcast %15 : vector<1x32xf32> to vector<16x32xf32>
    %17 = arith.mulf %14, %16 : vector<16x32xf32>
    %cst_14 = arith.constant dense<0.000000e+00> : vector<16xf32>
    %18 = vector.multi_reduction <add>, %17, %cst_14 [1] : vector<16x32xf32> to vector<16xf32>
    %19 = vector.shape_cast %18 : vector<16xf32> to vector<16x1xf32>
    %c0_15 = arith.constant 0 : index
    %c0_16 = arith.constant 0 : index
    %20 = vector.load %arg7[%c0_15, %c0_16] : memref<1x1xf32, #tpu.memory_space<vmem>>, vector<1x1xf32>
    %21 = vector.broadcast %20 : vector<1x1xf32> to vector<16x1xf32>
    %22 = arith.addf %19, %21 : vector<16x1xf32>
    %c0_17 = arith.constant 0 : index
    %c0_18 = arith.constant 0 : index
    %23 = vector.load %arg8[%c0_17, %c0_18] : memref<16x1xf32, #tpu.memory_space<vmem>>, vector<16x1xf32>
    tpu.vector_store %arg8[%c0_17, %c0_18], %22 {strides = array<i32>} : memref<16x1xf32, #tpu.memory_space<vmem>>, vector<16x1xf32>,
    return
  }
  func.func @transform_0(%arg0: i32) -> (i32, i32) {
    %c0_i32 = arith.constant 0 : i32
    %c0_i32_0 = arith.constant 0 : i32
    return %arg0, %c0_i32 : i32, i32
  }
  func.func @transform_1(%arg0: i32) -> (i32, i32) {
    %c0_i32 = arith.constant 0 : i32
    %c0_i32_0 = arith.constant 0 : i32
    %c0_i32_1 = arith.constant 0 : i32
    return %c0_i32, %c0_i32_0 : i32, i32
  }
  func.func @transform_2(%arg0: i32) -> (i32, i32) {
    %c0_i32 = arith.constant 0 : i32
    %c0_i32_0 = arith.constant 0 : i32
    %c0_i32_1 = arith.constant 0 : i32
    return %c0_i32, %c0_i32_0 : i32, i32
  }
  func.func @transform_3(%arg0: i32) -> (i32, i32) {
    %c0_i32 = arith.constant 0 : i32
    %c0_i32_0 = arith.constant 0 : i32
    %c0_i32_1 = arith.constant 0 : i32
    return %c0_i32, %c0_i32_0 : i32, i32
  }
  func.func @transform_4(%arg0: i32) -> (i32, i32) {
    %c0_i32 = arith.constant 0 : i32
    %c0_i32_0 = arith.constant 0 : i32
    %c0_i32_1 = arith.constant 0 : i32
    return %c0_i32, %c0_i32_0 : i32, i32
  }
  func.func @transform_5(%arg0: i32) -> (i32, i32) {
    %c0_i32 = arith.constant 0 : i32
    %c0_i32_0 = arith.constant 0 : i32
    %c0_i32_1 = arith.constant 0 : i32
    return %c0_i32, %c0_i32_0 : i32, i32
  }
  func.func @transform_6(%arg0: i32) -> (i32, i32) {
    %c0_i32 = arith.constant 0 : i32
    %c0_i32_0 = arith.constant 0 : i32
    %c0_i32_1 = arith.constant 0 : i32
    return %c0_i32, %c0_i32_0 : i32, i32
  }
  func.func @transform_7(%arg0: i32) -> (i32, i32) {
    %c0_i32 = arith.constant 0 : i32
    %c0_i32_0 = arith.constant 0 : i32
    return %arg0, %c0_i32 : i32, i32
  }
}

</mosaic_0001>

<llo_original>
// kernel: tpu_custom_call.1
$region0: #{tpu_custom_call.1}
  #allocation0 [shape = 'u32[]', space=smem, size = 0x4, offset = 0x4, fixed_abs, tag = 'smem constant byte address 0x4 - core index']
  #allocation1 [shape = 'u32[144,128]{1,0:T(1,128)}', space=vmem, size = 0x12000, scoped, tag = 'internal scratch']
  #allocation2 [shape = 'f32[1,1]{1,0:T(1,128)S(1)}', space=vmem, size = 0x200, scoped, tag = 'scoped memory for tpu_custom_call.1']
  %s0 = inlined_call_operand.vmem [shape: f32[16,88], index: 0, kind: input, shape index: {}]
  %s1 = inlined_call_operand.vmem [shape: f32[88,32], index: 1, kind: input, shape index: {}]
  %s2 = inlined_call_operand.vmem [shape: f32[1,32], index: 2, kind: input, shape index: {}]
  %s3 = inlined_call_operand.vmem [shape: f32[32,32], index: 3, kind: input, shape index: {}]
  %s4 = inlined_call_operand.vmem [shape: f32[1,32], index: 4, kind: input, shape index: {}]
  %s5 = inlined_call_operand.vmem [shape: f32[1,32], index: 5, kind: input, shape index: {}]
  %s6 = inlined_call_operand.<no memory space> [shape: f32[1,1], index: 6, kind: input, shape index: {}]
  %s7 = inlined_call_operand.vmem [shape: f32[16,1], index: 7, kind: output, shape index: {}]
  %s8 = sld [smem:[#allocation0]]
  $region38: #{tpu_custom_call.1} parent=0
    _
  %s10 = ssub.s32 1, %s8
  %s11 = scalar_select 0, %s10, %s8
  %v12 = vstv %s6
  %13 = vst [vmem:[#allocation2] sm:$0x1] %v12
  // Predicated region
  $region2: #{tpu_custom_call.1} parent=0 // pred_check
    _
  $region3: #{tpu_custom_call.1} parent=0 // pred_check_branch
    %15 = sbr.rel (0) target = $region5
  $region4: #{tpu_custom_call.1} parent=0 // pred_region
    _
  $region5: #{tpu_custom_call.1} parent=0 // pred_fallthru
    _
  // Predicated region
  $region6: #{tpu_custom_call.1} parent=0 // pred_check
    _
  $region7: #{tpu_custom_call.1} parent=0 // pred_check_branch
    %17 = sbr.rel (0) target = $region9
  $region8: #{tpu_custom_call.1} parent=0 // pred_region
    _
  $region9: #{tpu_custom_call.1} parent=0 // pred_fallthru
    _
  // Predicated region
  $region10: #{tpu_custom_call.1} parent=0 // pred_check
    _
  $region11: #{tpu_custom_call.1} parent=0 // pred_check_branch
    %19 = sbr.rel (0) target = $region13
  $region12: #{tpu_custom_call.1} parent=0 // pred_region
    _
  $region13: #{tpu_custom_call.1} parent=0 // pred_fallthru
    _
  // Predicated region
  $region14: #{tpu_custom_call.1} parent=0 // pred_check
    _
  $region15: #{tpu_custom_call.1} parent=0 // pred_check_branch
    %21 = sbr.rel (0) target = $region17
  $region16: #{tpu_custom_call.1} parent=0 // pred_region
    _
  $region17: #{tpu_custom_call.1} parent=0 // pred_fallthru
    _
  // Predicated region
  $region18: #{tpu_custom_call.1} parent=0 // pred_check
    _
  $region19: #{tpu_custom_call.1} parent=0 // pred_check_branch
    %23 = sbr.rel (0) target = $region21
  $region20: #{tpu_custom_call.1} parent=0 // pred_region
    _
  $region21: #{tpu_custom_call.1} parent=0 // pred_fallthru
    _
  // Predicated region
  $region22: #{tpu_custom_call.1} parent=0 // pred_check
    _
  $region23: #{tpu_custom_call.1} parent=0 // pred_check_branch
    %25 = sbr.rel (0) target = $region25
  $region24: #{tpu_custom_call.1} parent=0 // pred_region
    _
  $region25: #{tpu_custom_call.1} parent=0 // pred_fallthru
    _
  // Predicated region
  $region26: #{tpu_custom_call.1} parent=0 // pred_check
    _
  $region27: #{tpu_custom_call.1} parent=0 // pred_check_branch
    %27 = sbr.rel (0) target = $region29
  $region28: #{tpu_custom_call.1} parent=0 // pred_region
    _
  $region29: #{tpu_custom_call.1} parent=0 // pred_fallthru
    _
  %v28 = vld [vmem:[%s0] sm:$0xff]
  %v29 = vld [vmem:[%s0 + $0x8] sm:$0xff]
  %v30 = vld [vmem:[%s1] sm:$0xff]
  %v31 = vld [vmem:[%s1 + $0x8] sm:$0xff]
  %v32 = vld [vmem:[%s1 + $0x10] sm:$0xff]
  %v33 = vld [vmem:[%s1 + $0x18] sm:$0xff]
  %v34 = vld [vmem:[%s1 + $0x20] sm:$0xff]
  %v35 = vld [vmem:[%s1 + $0x28] sm:$0xff]
  %v36 = vld [vmem:[%s1 + $0x30] sm:$0xff]
  %v37 = vld [vmem:[%s1 + $0x38] sm:$0xff]
  %v38 = vld [vmem:[%s1 + $0x40] sm:$0xff]
  %v39 = vld [vmem:[%s1 + $0x48] sm:$0xff]
  %v40 = vld [vmem:[%s1 + $0x50] sm:$0xff]
  %v41 = vld [vmem:[%s2] sm:$0x1]
  %v43 = vlaneseq
  %v44 = vshrl.u32 %v43, 7
  %v45 = vsub.s32 0, %v44
  %v46 = vrot.slane %v41, %v45
  %vm48 = vcmask 719872
  %v50 = vsel %vm48, %v28, 0
  %v53 = vsel %vm48, %v29, 0
  %55 = vmatprep.subr.mxu0 0.0
  %56 = vmatpush1.msra.mxu0 %v30
  %57 = vmatprep.subr.mxu0 0.0
  %58 = vmatpush1.msra.mxu0 %v31
  %59 = vmatprep.subr.mxu0 0.0
  %60 = vmatpush1.msra.mxu0 %v32
  %61 = vmatprep.subr.mxu0 0.0
  %62 = vmatpush1.msra.mxu0 %v33
  %63 = vmatprep.subr.mxu0 0.0
  %64 = vmatpush1.msra.mxu0 %v34
  %65 = vmatprep.subr.mxu0 0.0
  %66 = vmatpush1.msra.mxu0 %v35
  %67 = vmatprep.subr.mxu0 0.0
  %68 = vmatpush1.msra.mxu0 %v36
  %69 = vmatprep.subr.mxu0 0.0
  %70 = vmatpush1.msra.mxu0 %v37
  %71 = vmatprep.subr.mxu0 0.0
  %72 = vmatpush1.msra.mxu0 %v38
  %73 = vmatprep.subr.mxu0 0.0
  %74 = vmatpush1.msra.mxu0 %v39
  %75 = vmatprep.subr.mxu0 0.0
  %76 = vmatpush1.msra.mxu0 %v40
  %77 = vmatprep.subr.mxu0 0.0
  %78 = vmatpush1.msra.mxu0 0.0
  %79 = vmatprep.subr.mxu0 0.0
  %80 = vmatpush1.msra.mxu0 0.0
  %81 = vmatprep.subr.mxu0 0.0
  %82 = vmatpush1.msra.mxu0 0.0
  %83 = vmatprep.subr.mxu0 0.0
  %84 = vmatpush1.msra.mxu0 0.0
  %85 = vmatprep.subr.mxu0 0.0
  %86 = vmatpush1.msra.mxu0 0.0
  %87 = vmatprep.subr.mxu0 0.0
  %88 = vmatpush1.msra.mxu0 0.0
  %89 = vmatprep.subr.mxu0 0.0
  %90 = vmatpush1.msra.mxu0 0.0
  %91 = vmatprep.subr.mxu0 0.0
  %92 = vmatpush1.msra.mxu0 0.0
  %93 = vmatprep.subr.mxu0 0.0
  %94 = vmatpush1.msra.mxu0 0.0
  %95 = vmatprep.subr.mxu0 0.0
  %96 = vmatpush1.msra.mxu0 0.0
  %97 = vmatprep.subr.mxu0 0.0
  %98 = vmatpush1.msra.mxu0 0.0
  %99 = vmatprep.subr.mxu0 0.0
  %100 = vmatpush1.msra.mxu0 0.0
  %101 = vmatprep.subr.mxu0 0.0
  %102 = vmatpush1.msra.mxu0 0.0
  %103 = vmatprep.subr.mxu0 0.0
  %104 = vmatpush1.msra.mxu0 0.0
  %105 = vmatprep.subr.mxu0 0.0
  %106 = vmatpush1.msra.mxu0 0.0
  %107 = vmatprep.subr.mxu0 0.0
  %108 = vmatpush1.msra.mxu0 0.0
  %109 = vmatprep.subr.mxu0 0.0
  %110 = vmatpush1.msra.mxu0 0.0
  %111 = vmatprep.subr.mxu0 0.0
  %112 = vmatpush1.msra.mxu0 0.0
  %113 = vmatprep.subr.mxu0 0.0
  %114 = vmatpush1.msra.mxu0 0.0
  %115 = vmatprep.subr.mxu0 0.0
  %116 = vmatpush1.msra.mxu0 0.0
  %117 = vmatprep.subr.mxu0 0.0
  %118 = vmatpush1.msra.mxu0 0.0
  %119 = vmatprep.mubr.f32.mxu0 0.0
  %120 = vmatmul.mubr.f32.gmra.mrb[0].mxu0 %v50
  %v121 = vpop.f32.mrb[0].mxu0
  %v122 = vadd.f32 %v46, %v121
  %v123 = vpop.f32.mrb[0].mxu0
  %124 = vmatprep.mubr.f32.mxu0 0.0
  %125 = vmatmul.mubr.f32.gmra.mrb[0].mxu0 %v53
  %v126 = vpop.f32.mrb[0].mxu0
  %v127 = vadd.f32 %v46, %v126
  %v128 = vpop.f32.mrb[0].mxu0
  %129 = vdwg.mxu0
  %v130 = vmax.f32 %v122, 0.0
  %v131 = vmax.f32 %v127, 0.0
  %v132 = vld [vmem:[%s3] sm:$0xff]
  %v133 = vld [vmem:[%s3 + $0x8] sm:$0xff]
  %v134 = vld [vmem:[%s3 + $0x10] sm:$0xff]
  %v135 = vld [vmem:[%s3 + $0x18] sm:$0xff]
  %v136 = vld [vmem:[%s4] sm:$0x1]
  %v138 = vlaneseq
  %v139 = vshrl.u32 %v138, 7
  %v140 = vsub.s32 0, %v139
  %v141 = vrot.slane %v136, %v140
  %vm143 = vcmask 261120
  %v145 = vsel %vm143, %v130, 0
  %v148 = vsel %vm143, %v131, 0
  %150 = vmatprep.subr.mxu0 0.0
  %151 = vmatpush1.msra.mxu0 %v132
  %152 = vmatprep.subr.mxu0 0.0
  %153 = vmatpush1.msra.mxu0 %v133
  %154 = vmatprep.subr.mxu0 0.0
  %155 = vmatpush1.msra.mxu0 %v134
  %156 = vmatprep.subr.mxu0 0.0
  %157 = vmatpush1.msra.mxu0 %v135
  %158 = vmatprep.subr.mxu0 0.0
  %159 = vmatpush1.msra.mxu0 0.0
  %160 = vmatprep.subr.mxu0 0.0
  %161 = vmatpush1.msra.mxu0 0.0
  %162 = vmatprep.subr.mxu0 0.0
  %163 = vmatpush1.msra.mxu0 0.0
  %164 = vmatprep.subr.mxu0 0.0
  %165 = vmatpush1.msra.mxu0 0.0
  %166 = vmatprep.subr.mxu0 0.0
  %167 = vmatpush1.msra.mxu0 0.0
  %168 = vmatprep.subr.mxu0 0.0
  %169 = vmatpush1.msra.mxu0 0.0
  %170 = vmatprep.subr.mxu0 0.0
  %171 = vmatpush1.msra.mxu0 0.0
  %172 = vmatprep.subr.mxu0 0.0
  %173 = vmatpush1.msra.mxu0 0.0
  %174 = vmatprep.subr.mxu0 0.0
  %175 = vmatpush1.msra.mxu0 0.0
  %176 = vmatprep.subr.mxu0 0.0
  %177 = vmatpush1.msra.mxu0 0.0
  %178 = vmatprep.subr.mxu0 0.0
  %179 = vmatpush1.msra.mxu0 0.0
  %180 = vmatprep.subr.mxu0 0.0
  %181 = vmatpush1.msra.mxu0 0.0
  %182 = vmatprep.subr.mxu0 0.0
  %183 = vmatpush1.msra.mxu0 0.0
  %184 = vmatprep.subr.mxu0 0.0
  %185 = vmatpush1.msra.mxu0 0.0
  %186 = vmatprep.subr.mxu0 0.0
  %187 = vmatpush1.msra.mxu0 0.0
  %188 = vmatprep.subr.mxu0 0.0
  %189 = vmatpush1.msra.mxu0 0.0
  %190 = vmatprep.subr.mxu0 0.0
  %191 = vmatpush1.msra.mxu0 0.0
  %192 = vmatprep.subr.mxu0 0.0
  %193 = vmatpush1.msra.mxu0 0.0
  %194 = vmatprep.subr.mxu0 0.0
  %195 = vmatpush1.msra.mxu0 0.0
  %196 = vmatprep.subr.mxu0 0.0
  %197 = vmatpush1.msra.mxu0 0.0
  %198 = vmatprep.subr.mxu0 0.0
  %199 = vmatpush1.msra.mxu0 0.0
  %200 = vmatprep.subr.mxu0 0.0
  %201 = vmatpush1.msra.mxu0 0.0
  %202 = vmatprep.subr.mxu0 0.0
  %203 = vmatpush1.msra.mxu0 0.0
  %204 = vmatprep.subr.mxu0 0.0
  %205 = vmatpush1.msra.mxu0 0.0
  %206 = vmatprep.subr.mxu0 0.0
  %207 = vmatpush1.msra.mxu0 0.0
  %208 = vmatprep.subr.mxu0 0.0
  %209 = vmatpush1.msra.mxu0 0.0
  %210 = vmatprep.subr.mxu0 0.0
  %211 = vmatpush1.msra.mxu0 0.0
  %212 = vmatprep.subr.mxu0 0.0
  %213 = vmatpush1.msra.mxu0 0.0
  %214 = vmatprep.mubr.f32.mxu0 0.0
  %215 = vmatmul.mubr.f32.gmra.mrb[0].mxu0 %v145
  %v216 = vpop.f32.mrb[0].mxu0
  %v217 = vadd.f32 %v141, %v216
  %v218 = vpop.f32.mrb[0].mxu0
  %219 = vmatprep.mubr.f32.mxu0 0.0
  %220 = vmatmul.mubr.f32.gmra.mrb[0].mxu0 %v148
  %v221 = vpop.f32.mrb[0].mxu0
  %v222 = vadd.f32 %v141, %v221
  %v223 = vpop.f32.mrb[0].mxu0
  %224 = vdwg.mxu0
  %v225 = vmax.f32 %v217, 0.0
  %v226 = vmax.f32 %v222, 0.0
  %v227 = vld [vmem:[%s5] sm:$0x1]
  %v229 = vlaneseq
  %v230 = vshrl.u32 %v229, 7
  %v231 = vsub.s32 0, %v230
  %v232 = vrot.slane %v227, %v231
  %v234 = vmul.f32 %v225, %v232
  %v235 = vmul.f32 %v226, %v232
  %v236 = vsel %vm143, %v234, 0.0
  %237 = vadd.xlane.f32.xlu0 %v236
  %v238 = vpop.xlane.xlu0 %237
  %v239 = vsel %vm143, %v235, 0.0
  %240 = vadd.xlane.f32.xlu0 %v239
  %v241 = vpop.xlane.xlu0 %240
  %v242 = vld [vmem:[#allocation2] sm:$0x1]
  %v244 = vlaneseq
  %v245 = vshrl.u32 %v244, 7
  %v246 = vsub.s32 0, %v245
  %v247 = vrot.slane %v242, %v246
  %v249 = vadd.f32 %v238, %v247
  %v250 = vadd.f32 %v241, %v247
  %vm251 = vcmask 7168
  %252 = vst.msk [vmem:[%s7] sm:$0xff] %vm251, %v249
  %253 = vst.msk [vmem:[%s7 + $0x8] sm:$0xff] %vm251, %v250
  // Predicated region
  $region30: #{tpu_custom_call.1} parent=0 // pred_check
    _
  $region31: #{tpu_custom_call.1} parent=0 // pred_check_branch
    %255 = sbr.rel (0) target = $region33
  $region32: #{tpu_custom_call.1} parent=0 // pred_region
    _
  $region33: #{tpu_custom_call.1} parent=0 // pred_fallthru
    _
  // Predicated region
  $region34: #{tpu_custom_call.1} parent=0 // pred_check
    _
  $region35: #{tpu_custom_call.1} parent=0 // pred_check_branch
    %257 = sbr.rel (0) target = $region37
  $region36: #{tpu_custom_call.1} parent=0 // pred_region
    _
  $region37: #{tpu_custom_call.1} parent=0 // pred_fallthru
    _

</llo_original>
